<compile_context>
chip_gen: v7x
topology: tpu7x:2x2x1
jax: 0.10.0
libtpu: 0.0.40
codegen_flags: <defaults>
</compile_context>

<pallas_src>
import functools
import math

import jax
import jax.numpy as jnp
from jax.experimental import pallas as pl
from jax.experimental.pallas import tpu as pltpu


def _round_up(x, m):
    return (x + m - 1) // m * m


def _sigmoid(x):
    # sigmoid(x) = 0.5 * tanh(0.5 * x) + 0.5 : single EUP transcendental.
    return 0.5 * jnp.tanh(0.5 * x) + 0.5


def _pick_tile(dim, pref, unit):
    """Pick a tile size for `dim`.

    Returns (tile, needs_padding).  Preference order:
      1. dim itself when dim <= pref (full-extent blocks are always legal),
      2. the largest multiple of `unit` <= pref that divides dim exactly,
      3. round_up(pref, unit) with padding as a fallback.
    """
    if dim <= pref:
        return dim, False
    pref = max(unit, pref // unit * unit)
    floor = max(unit, pref // 4)
    t = pref
    while t >= floor:
        if dim % t == 0:
            return t, False
        t -= unit
    return pref, True


# ---------------------------------------------------------------------------
# Kernels
# ---------------------------------------------------------------------------
def _l0_partial(logits, *, temp, imin, imax, n_rows, n_cols, tm, tn, masked):
    """Partial sum of the hard-concrete L0 penalty matrix for this tile."""
    shift = temp * math.log2(-imin / imax)
    l0 = _sigmoid(logits - shift)
    if masked:  # only the pad-fallback path pays for the validity mask
        row = pl.program_id(0) * tm + jax.lax.broadcasted_iota(
            jnp.int32, logits.shape, 0)
        col = pl.program_id(1) * tn + jax.lax.broadcasted_iota(
            jnp.int32, logits.shape, 1)
        l0 = jnp.where((row < n_rows) & (col < n_cols), l0, 0.0)
    return jnp.sum(l0)


def _eval_kernel(x_ref, wt_ref, b_ref, s_ref, pen_ref, *,
                 temp, imin, imax, n_rows, n_cols, tm, tn, masked):
    # logits = x @ W^T + b   (bf16 MXU operands, f32 accumulate)
    logits = jnp.dot(x_ref[...].astype(jnp.bfloat16), wt_ref[...],
                     preferred_element_type=jnp.float32) + b_ref[...]
    s = _sigmoid(logits) * (imax - imin) + imin
    s_ref[...] = jnp.clip(s, 0.0, 1.0).astype(s_ref.dtype)
    pen_ref[0, 0] = _l0_partial(logits, temp=temp, imin=imin, imax=imax,
                                n_rows=n_rows, n_cols=n_cols, tm=tm, tn=tn,
                                masked=masked)


def _train_kernel(x_ref, wt_ref, b_ref, noise_ref, s_ref, pen_ref, *,
                  temp, imin, imax, n_rows, n_cols, tm, tn, masked):
    logits = jnp.dot(x_ref[...].astype(jnp.bfloat16), wt_ref[...],
                     preferred_element_type=jnp.float32) + b_ref[...]
    # Hard-concrete: s = sigmoid((loc + log2(u) - log2(1-u)) / temp); the
    # logistic noise is precomputed in the wrapper and streamed as bf16.
    # TODO(synk): generate the noise in-kernel with pltpu.prng_seed /
    # prng_random_bits (saves the [N, n_edge] bf16 HBM read) once the run
    # harness can lower those TPU-only primitives.
    sum_log = logits + noise_ref[...].astype(jnp.float32)
    s = _sigmoid(sum_log * (1.0 / temp)) * (imax - imin) + imin
    s_ref[...] = jnp.clip(s, 0.0, 1.0).astype(s_ref.dtype)
    pen_ref[0, 0] = _l0_partial(logits, temp=temp, imin=imin, imax=imax,
                                n_rows=n_rows, n_cols=n_cols, tm=tm, tn=tn,
                                masked=masked)


# ---------------------------------------------------------------------------
# Wrapper
# ---------------------------------------------------------------------------
def prepare_params(w, b):
    """Hoisted parameter preprocessing (do once, not per forward call)."""
    wt = w.T.astype(jnp.bfloat16)              # [d, n_edge]
    b2 = b.astype(jnp.float32).reshape(1, -1)  # [1, n_edge]
    return wt, b2


def linear_transform_forward(x, wt, b2, num_graphs, *, temp, inter_min,
                             inter_max, is_training, noise=None,
                             noise_key=None, tm=256, tn=1024,
                             out_dtype=jnp.bfloat16):
    """Mirror of LinearTransform.forward.

    x: [N, d] f32.  wt/b2: outputs of prepare_params().  num_graphs is static
    (== batch.max()+1), avoiding a host sync in the forward path.
    Returns (edge_binary [N, n_edge] out_dtype, l0_penalty f32 scalar,
    n_edges [num_graphs] int32).
    """
    N, d = x.shape
    n_edge = wt.shape[1]
    out_bytes = jnp.dtype(out_dtype).itemsize

    # Row tiles: multiple of 16 (bf16 sublane packing) or the full dim.
    # Edge tiles: multiple of 128 (lane-dense unmasked stores) or full dim.
    TM, pad_m = _pick_tile(N, tm, 16)
    TN, pad_n = _pick_tile(n_edge, tn, 128)
    Np = _round_up(N, TM) if pad_m else N
    Ep = _round_up(n_edge, TN) if pad_n else n_edge
    gm, gn = Np // TM, Ep // TN
    masked = pad_m or pad_n

    if is_training and noise is None:
        if noise_key is None:
            noise_key = jax.random.PRNGKey(0)
        u = jax.random.uniform(noise_key, (N, n_edge), jnp.float32,
                               1e-6, 1.0 - 1e-6)
        noise = (jnp.log2(u) - jnp.log2(1.0 - u)).astype(jnp.bfloat16)

    xk, wtk, bk, nk = x, wt, b2, noise
    if pad_m:
        xk = jnp.pad(xk, ((0, Np - N), (0, 0)))
        if is_training:
            nk = jnp.pad(nk, ((0, Np - N), (0, 0)))
    if pad_n:
        wtk = jnp.pad(wtk, ((0, 0), (0, Ep - n_edge)))
        bk = jnp.pad(bk, ((0, 0), (0, Ep - n_edge)))
        if is_training:
            nk = jnp.pad(nk, ((0, 0), (0, Ep - n_edge)))
    if is_training:
        nk = nk.astype(jnp.bfloat16)

    common = dict(temp=float(temp), imin=float(inter_min),
                  imax=float(inter_max), n_rows=N, n_cols=n_edge,
                  tm=TM, tn=TN, masked=masked)

    in_specs = [
        pl.BlockSpec((TM, d), lambda i, j: (i, 0)),   # x (f32, cast in-kernel)
        pl.BlockSpec((d, TN), lambda i, j: (0, j)),   # W^T (bf16)
        pl.BlockSpec((1, TN), lambda i, j: (0, j)),   # bias (f32)
    ]
    if is_training:
        in_specs.append(pl.BlockSpec((TM, TN), lambda i, j: (i, j)))  # noise
    out_specs = (
        pl.BlockSpec((TM, TN), lambda i, j: (i, j)),
        pl.BlockSpec((1, 1), lambda i, j: (i, j),
                     memory_space=pltpu.MemorySpace.SMEM),
    )
    out_shape = (
        jax.ShapeDtypeStruct((Np, Ep), out_dtype),
        jax.ShapeDtypeStruct((gm, gn), jnp.float32),
    )

    # Per-step VMEM footprint (pipeline double-buffers it); cap at 48 MiB so
    # the same setting fits 64 MiB-VMEM v7x as well as 128 MiB v5e/v6e.
    est = (TM * d * 4 + d * TN * 2 + TN * 4 + TM * TN * out_bytes
           + (TM * TN * 2 if is_training else 0))
    vmem_limit = int(min(max(8 * est, 32 * 1024 * 1024), 48 * 1024 * 1024))
    cparams = pltpu.CompilerParams(
        dimension_semantics=("parallel", "parallel"),
        vmem_limit_bytes=vmem_limit)
    cost = pl.CostEstimate(
        flops=2 * N * d * n_edge,
        transcendentals=2 * N * n_edge,          # tanh for s and for l0
        bytes_accessed=int(N * d * 4 + d * n_edge * 2 + n_edge * 4
                           + N * n_edge * out_bytes
                           + (N * n_edge * 2 if is_training else 0)))

    kern = functools.partial(
        _train_kernel if is_training else _eval_kernel, **common)
    grid_spec = pltpu.PrefetchScalarGridSpec(
        num_scalar_prefetch=0, grid=(gm, gn),
        in_specs=in_specs, out_specs=out_specs)
    args = (xk, wtk, bk, nk) if is_training else (xk, wtk, bk)

    # TODO(synk): add a K-tiled path (3rd "arbitrary" grid axis + f32 VMEM
    # accumulator scratch) for very large d so the per-step footprint stays
    # bounded on 64 MiB-VMEM v7x.
    s_full, pen_parts = pl.pallas_call(
        kern, out_shape=out_shape, grid_spec=grid_spec,
        compiler_params=cparams, cost_estimate=cost)(*args)

    edge_binary = s_full if not masked else s_full[:N, :n_edge]
    l0_penalty = jnp.sum(pen_parts) / float(N * n_edge)
    # TODO(synk): torch returns an int64 LongTensor; int32 here (TPU default).
    n_edges = jnp.full((num_graphs,), n_edge, dtype=jnp.int32)
    return edge_binary, l0_penalty, n_edges


# ---------------------------------------------------------------------------
# Parameter init (matches nn.Linear + xavier_uniform_, bias = 0)
# ---------------------------------------------------------------------------
def init_params(key, d, n_edge):
    bound = math.sqrt(6.0 / (d + n_edge))
    w = jax.random.uniform(key, (n_edge, d), jnp.float32, -bound, bound)
    b = jnp.zeros((n_edge,), jnp.float32)
    return w, b


# ---------------------------------------------------------------------------
# Pure-JAX reference (same bf16 matmul operands / base-2 logs as the spec)
# ---------------------------------------------------------------------------
def _reference(x, w, b, *, temp, imin, imax, is_training, noise=None):
    logits = jnp.dot(x.astype(jnp.bfloat16), w.T.astype(jnp.bfloat16),
                     preferred_element_type=jnp.float32) + b
    if is_training:
        s = jax.nn.sigmoid((logits + noise.astype(jnp.float32)) / temp)
    else:
        s = jax.nn.sigmoid(logits)
    s = jnp.clip(s * (imax - imin) + imin, 0.0, 1.0)
    pen = jnp.mean(jax.nn.sigmoid(logits - temp * math.log2(-imin / imax)))
    return s, pen


# ---------------------------------------------------------------------------
# Main
# ---------------------------------------------------------------------------
if __name__ == "__main__":
    key = jax.random.PRNGKey(0)
    kx, kw, kn, kx2, kw2 = jax.random.split(key, 5)

    temp, inter_min, inter_max = 2.0 / 3.0, -0.1, 1.1   # typical l0_para

    # --- Case 1: N=40 nodes (2 graphs of 20), d=32, n_edge=128 ------------
    N, d, n_edge, num_graphs = 40, 32, 128, 2
    x = jax.random.normal(kx, (N, d), jnp.float32)
    batch = jnp.repeat(jnp.arange(num_graphs, dtype=jnp.int32),
                       N // num_graphs)
    w, b = init_params(kw, d, n_edge)
    wt, b2 = prepare_params(w, b)

    fwd = functools.partial(linear_transform_forward, temp=temp,
                            inter_min=inter_min, inter_max=inter_max)

    # Eval path: TM=40, TN=128 -> grid (1,1), no padding, no slice copy.
    eb, pen, n_edges = fwd(x, wt, b2, num_graphs, is_training=False)
    jax.block_until_ready((eb, pen, n_edges))

    # Training path: logistic noise streamed in as bf16.
    u = jax.random.uniform(kn, (N, n_edge), jnp.float32, 1e-6, 1.0 - 1e-6)
    noise = (jnp.log2(u) - jnp.log2(1.0 - u)).astype(jnp.bfloat16)
    eb_tr, pen_tr, _ = fwd(x, wt, b2, num_graphs, is_training=True,
                           noise=noise)
    jax.block_until_ready((eb_tr, pen_tr))

    s_ref, pen_ref = _reference(x, w, b, temp=temp, imin=inter_min,
                                imax=inter_max, is_training=False)
    s_ref_tr, _ = _reference(x, w, b, temp=temp, imin=inter_min,
                             imax=inter_max, is_training=True, noise=noise)

    assert eb.shape == (N, n_edge) and eb.dtype == jnp.bfloat16
    assert jnp.allclose(eb.astype(jnp.float32), s_ref, atol=8e-3)
    assert jnp.allclose(pen, pen_ref, atol=1e-4)
    assert eb_tr.shape == (N, n_edge)
    assert jnp.allclose(eb_tr.astype(jnp.float32), s_ref_tr, atol=8e-3)
    assert float(eb_tr.min()) >= 0.0 and float(eb_tr.max()) <= 1.0
    # The L0 penalty depends only on the logits -> identical on both paths.
    assert jnp.allclose(pen_tr, pen, atol=1e-4)
    assert n_edges.shape == (num_graphs,) and int(n_edges[0]) == n_edge
    assert int(batch.max()) + 1 == num_graphs

    # --- Case 2: multi-tile grid with exact division (no pad, no slice) ---
    N2, n_edge2 = 64, 256
    x2 = jax.random.normal(kx2, (N2, d), jnp.float32)
    w2, bb2 = init_params(kw2, d, n_edge2)
    wt2, b22 = prepare_params(w2, bb2)
    eb2, pen2, _ = linear_transform_forward(
        x2, wt2, b22, 2, temp=temp, inter_min=inter_min,
        inter_max=inter_max, is_training=False, tm=32, tn=128)   # grid (2, 2)
    jax.block_until_ready((eb2, pen2))
    s2_ref, pen2_ref = _reference(x2, w2, bb2, temp=temp, imin=inter_min,
                                  imax=inter_max, is_training=False)
    assert eb2.shape == (N2, n_edge2)
    assert jnp.allclose(eb2.astype(jnp.float32), s2_ref, atol=8e-3)
    assert jnp.allclose(pen2, pen2_ref, atol=1e-4)

    # --- Case 3: pad-fallback path (tile does not divide N) ---------------
    eb3, pen3, _ = linear_transform_forward(
        x, wt, b2, num_graphs, temp=temp, inter_min=inter_min,
        inter_max=inter_max, is_training=False, tm=16, tn=128)   # Np=48 > N
    jax.block_until_ready((eb3, pen3))
    assert eb3.shape == (N, n_edge)
    assert jnp.allclose(eb3.astype(jnp.float32), s_ref, atol=8e-3)
    assert jnp.allclose(pen3, pen_ref, atol=1e-4)

    print("KERNEL_OK")
</pallas_src>

<mosaic_0001>
module attributes {stable_mosaic.version = 11 : i64} {
  func.func @_eval_kernel(%arg0: i32, %arg1: i32, %arg2: memref<40x32xf32, #tpu.memory_space<vmem>>, %arg3: memref<32x128xbf16, #tpu.memory_space<vmem>>, %arg4: memref<1x128xf32, #tpu.memory_space<vmem>>, %arg5: memref<40x128xbf16, #tpu.memory_space<vmem>>, %arg6: memref<1x1xf32, #tpu.memory_space<smem>>) attributes {dimension_semantics = [#tpu.dimension_semantics<parallel>, #tpu.dimension_semantics<parallel>], iteration_bounds = array<i64: 1, 1>, scalar_prefetch = 0 : i64, scratch_operands = 0 : i64, tpu.core_type = #tpu.core_type<tc>, window_params = [{transform_indices = @transform_0, window_bounds = array<i64: 40, 32>}, {transform_indices = @transform_1, window_bounds = array<i64: 32, 128>}, {transform_indices = @transform_2, window_bounds = array<i64: 1, 128>}, {transform_indices = @transform_3, window_bounds = array<i64: 40, 128>}, {transform_indices = @transform_4, window_bounds = array<i64: 1, 1>}]} {
    %c0 = arith.constant 0 : index
    %c0_0 = arith.constant 0 : index
    %0 = vector.load %arg2[%c0, %c0_0] : memref<40x32xf32, #tpu.memory_space<vmem>>, vector<40x32xf32>
    %1 = arith.truncf %0 : vector<40x32xf32> to vector<40x32xbf16>
    %c0_1 = arith.constant 0 : index
    %c0_2 = arith.constant 0 : index
    %2 = vector.load %arg3[%c0_1, %c0_2] : memref<32x128xbf16, #tpu.memory_space<vmem>>, vector<32x128xbf16>
    %cst = arith.constant dense<0.000000e+00> : vector<40x128xf32>
    %3 = tpu.matmul %1, %2, %cst {dimension_numbers = #tpu.dot_dimension_numbers<[1], [0], [0], [1], [0, 0, 1, 1], [], []>} : vector<40x32xbf16>, vector<32x128xbf16>, vector<40x128xf32> -> vector<40x128xf32>
    %c0_3 = arith.constant 0 : index
    %c0_4 = arith.constant 0 : index
    %4 = vector.load %arg4[%c0_3, %c0_4] : memref<1x128xf32, #tpu.memory_space<vmem>>, vector<1x128xf32>
    %5 = vector.broadcast %4 : vector<1x128xf32> to vector<40x128xf32>
    %6 = arith.addf %3, %5 : vector<40x128xf32>
    %cst_5 = arith.constant 5.000000e-01 : f32
    %7 = vector.broadcast %cst_5 : f32 to vector<40x128xf32>
    %8 = arith.mulf %7, %6 : vector<40x128xf32>
    %9 = math.tanh %8 : vector<40x128xf32>
    %cst_6 = arith.constant 5.000000e-01 : f32
    %10 = vector.broadcast %cst_6 : f32 to vector<40x128xf32>
    %11 = arith.mulf %10, %9 : vector<40x128xf32>
    %cst_7 = arith.constant 5.000000e-01 : f32
    %12 = vector.broadcast %cst_7 : f32 to vector<40x128xf32>
    %13 = arith.addf %11, %12 : vector<40x128xf32>
    %cst_8 = arith.constant 1.200000e+00 : f32
    %14 = vector.broadcast %cst_8 : f32 to vector<40x128xf32>
    %15 = arith.mulf %13, %14 : vector<40x128xf32>
    %cst_9 = arith.constant -1.000000e-01 : f32
    %16 = vector.broadcast %cst_9 : f32 to vector<40x128xf32>
    %17 = arith.addf %15, %16 : vector<40x128xf32>
    %cst_10 = arith.constant 0.000000e+00 : f32
    %cst_11 = arith.constant 1.000000e+00 : f32
    %18 = vector.broadcast %cst_10 : f32 to vector<40x128xf32>
    %19 = arith.maximumf %18, %17 : vector<40x128xf32>
    %20 = vector.broadcast %cst_11 : f32 to vector<40x128xf32>
    %21 = arith.minimumf %20, %19 : vector<40x128xf32>
    %22 = arith.truncf %21 : vector<40x128xf32> to vector<40x128xbf16>
    %c0_12 = arith.constant 0 : index
    %c0_13 = arith.constant 0 : index
    %23 = vector.load %arg5[%c0_12, %c0_13] : memref<40x128xbf16, #tpu.memory_space<vmem>>, vector<40x128xbf16>
    tpu.vector_store %arg5[%c0_12, %c0_13], %22 {strides = array<i32>} : memref<40x128xbf16, #tpu.memory_space<vmem>>, vector<40x128xbf16>,
    %cst_14 = arith.constant -2.30628777 : f32
    %24 = vector.broadcast %cst_14 : f32 to vector<40x128xf32>
    %25 = arith.subf %6, %24 : vector<40x128xf32>
    %cst_15 = arith.constant 5.000000e-01 : f32
    %26 = vector.broadcast %cst_15 : f32 to vector<40x128xf32>
    %27 = arith.mulf %26, %25 : vector<40x128xf32>
    %28 = math.tanh %27 : vector<40x128xf32>
    %cst_16 = arith.constant 5.000000e-01 : f32
    %29 = vector.broadcast %cst_16 : f32 to vector<40x128xf32>
    %30 = arith.mulf %29, %28 : vector<40x128xf32>
    %cst_17 = arith.constant 5.000000e-01 : f32
    %31 = vector.broadcast %cst_17 : f32 to vector<40x128xf32>
    %32 = arith.addf %30, %31 : vector<40x128xf32>
    %33 = vector.shape_cast %32 : vector<40x128xf32> to vector<1x40x128xf32>
    %cst_18 = arith.constant dense<0.000000e+00> : vector<1xf32>
    %34 = vector.multi_reduction <add>, %33, %cst_18 [1, 2] : vector<1x40x128xf32> to vector<1xf32>
    %35 = vector.shape_cast %34 : vector<1xf32> to vector<1x1x1xf32>
    %36 = vector.extract %35[0, 0, 0] : f32 from vector<1x1x1xf32>
    %c0_19 = arith.constant 0 : index
    %c0_20 = arith.constant 0 : index
    %37 = memref.load %arg6[%c0_19, %c0_20] : memref<1x1xf32, #tpu.memory_space<smem>>
    memref.store %36, %arg6[%c0_19, %c0_20] : memref<1x1xf32, #tpu.memory_space<smem>>
    return
  }
  func.func @transform_0(%arg0: i32, %arg1: i32) -> (i32, i32) {
    %c0_i32 = arith.constant 0 : i32
    %c0_i32_0 = arith.constant 0 : i32
    return %arg0, %c0_i32 : i32, i32
  }
  func.func @transform_1(%arg0: i32, %arg1: i32) -> (i32, i32) {
    %c0_i32 = arith.constant 0 : i32
    %c0_i32_0 = arith.constant 0 : i32
    return %c0_i32, %arg1 : i32, i32
  }
  func.func @transform_2(%arg0: i32, %arg1: i32) -> (i32, i32) {
    %c0_i32 = arith.constant 0 : i32
    %c0_i32_0 = arith.constant 0 : i32
    return %c0_i32, %arg1 : i32, i32
  }
  func.func @transform_3(%arg0: i32, %arg1: i32) -> (i32, i32) {
    %c0_i32 = arith.constant 0 : i32
    return %arg0, %arg1 : i32, i32
  }
  func.func @transform_4(%arg0: i32, %arg1: i32) -> (i32, i32) {
    %c0_i32 = arith.constant 0 : i32
    return %arg0, %arg1 : i32, i32
  }
}

</mosaic_0001>

<llo_original>
// kernel: tpu_custom_call.1
$region0: #{tpu_custom_call.1}
  #allocation0 [shape = 'u32[]', space=smem, size = 0x4, offset = 0x4, fixed_abs, tag = 'smem constant byte address 0x4 - core index']
  #allocation1 [shape = 'u32[144,128]{1,0:T(1,128)}', space=vmem, size = 0x12000, scoped, tag = 'internal scratch']
  %s0 = inlined_call_operand.vmem [shape: f32[40,32], index: 0, kind: input, shape index: {}]
  %s1 = inlined_call_operand.vmem [shape: bf16[32,128], index: 1, kind: input, shape index: {}]
  %s2 = inlined_call_operand.vmem [shape: f32[1,128], index: 2, kind: input, shape index: {}]
  %s3 = inlined_call_operand.hbm [shape: bf16[40,128], index: 3, kind: output, shape index: {0}]
  %s4 = inlined_call_operand.hbm [shape: f32[1,1], index: 4, kind: output, shape index: {1}]
  %5 = xla_tuple %s3, %s4
  %s6 = sld [smem:[#allocation0]]
  $region30: #{tpu_custom_call.1} parent=0
    _
  %s8 = ssub.s32 1, %s6
  %s9 = scalar_select 0, %s8, %s6
  $region1: #{tpu_custom_call.1} parent=0
    #allocation2 [shape = 'u8[10240]{0}', space=vmem, size = 0x2800, scoped, tag = 'output window, operand 0, single buffered']
    #allocation3 [shape = 's32[1]{0}', space=sflag, size = 0x4, scoped, tag = 'scoped memory for tpu_custom_call.1']
    #allocation4 [shape = 's32[1]{0}', space=sflag, size = 0x4, scoped, tag = 'scoped memory for tpu_custom_call.1']
    #allocation5 [shape = 'u8[512]{0}', space=smem, size = 0x200, scoped, tag = 'output window, operand 1, single buffered']
    %10 = vsyncpa [#allocation3], 0
    %11 = vsyncpa [#allocation4], 0
    // Predicated region
    $region2: #{tpu_custom_call.1} parent=1 // pred_check
      _
    $region3: #{tpu_custom_call.1} parent=1 // pred_check_branch
      %13 = sbr.rel (0) target = $region5
    $region4: #{tpu_custom_call.1} parent=1 // pred_region
      _
    $region5: #{tpu_custom_call.1} parent=1 // pred_fallthru
      _
    // Predicated region
    $region6: #{tpu_custom_call.1} parent=1 // pred_check
      _
    $region7: #{tpu_custom_call.1} parent=1 // pred_check_branch
      %15 = sbr.rel (0) target = $region9
    $region8: #{tpu_custom_call.1} parent=1 // pred_region
      _
    $region9: #{tpu_custom_call.1} parent=1 // pred_fallthru
      _
    // Predicated region
    $region10: #{tpu_custom_call.1} parent=1 // pred_check
      _
    $region11: #{tpu_custom_call.1} parent=1 // pred_check_branch
      %17 = sbr.rel (0) target = $region13
    $region12: #{tpu_custom_call.1} parent=1 // pred_region
      _
    $region13: #{tpu_custom_call.1} parent=1 // pred_fallthru
      _
    %v19 = vld [vmem:[%s0] sm:$0xff]
    %v20 = vld [vmem:[%s0 + $0x8] sm:$0xff]
    %v21 = vld [vmem:[%s0 + $0x10] sm:$0xff]
    %v22 = vld [vmem:[%s0 + $0x18] sm:$0xff]
    %v23 = vld [vmem:[%s0 + $0x20] sm:$0xff]
    %v24 = vpack.c.bf16 %v20, %v19
    %v25 = vpack.c.bf16 %v22, %v21
    %v26 = vpack.c.bf16 %v23, %v23
    %v27 = vld [vmem:[%s1] sm:$0xf]
    %v28 = vld [vmem:[%s1 + $0x4] sm:$0xf]
    %v29 = vld [vmem:[%s1 + $0x8] sm:$0xf]
    %v30 = vld [vmem:[%s1 + $0xc] sm:$0xf]
    %v31 = vld [vmem:[%s2] sm:$0x1]
    %v33 = vlaneseq
    %v34 = vshrl.u32 %v33, 7
    %v35 = vsub.s32 0, %v34
    %v36 = vrot.slane %v31, %v35
    %v42 = vunpack.c.l.b16 %v27
    %v43 = vunpack.c.l.b16 %v28
    %v44 = vunpack.c.l.b16 %v29
    %v45 = vunpack.c.l.b16 %v30
    %v46 = vpack.c.b16 %v43, %v42
    %v47 = vpack.c.b16 %v45, %v44
    %vm50 = vcmask 261120
    %v52 = vsel %vm50, %v24, 0
    %v55 = vsel %vm50, %v25, 0
    %v58 = vsel %vm50, %v26, 0
    %60 = vmatprep.subr.bf16.mxu0 0
    %61 = vmatpush1.bf16.msra.mxu0 %v46
    %62 = vmatprep.subr.bf16.mxu0 0
    %63 = vmatpush1.bf16.msra.mxu0 %v47
    %64 = vmatprep.subr.bf16.mxu0 0
    %65 = vmatpush1.bf16.msra.mxu0 0
    %66 = vmatprep.subr.bf16.mxu0 0
    %67 = vmatpush1.bf16.msra.mxu0 0
    %68 = vmatprep.subr.bf16.mxu0 0
    %69 = vmatpush1.bf16.msra.mxu0 0
    %70 = vmatprep.subr.bf16.mxu0 0
    %71 = vmatpush1.bf16.msra.mxu0 0
    %72 = vmatprep.subr.bf16.mxu0 0
    %73 = vmatpush1.bf16.msra.mxu0 0
    %74 = vmatprep.subr.bf16.mxu0 0
    %75 = vmatpush1.bf16.msra.mxu0 0
    %76 = vmatprep.subr.bf16.mxu0 0
    %77 = vmatpush1.bf16.msra.mxu0 0
    %78 = vmatprep.subr.bf16.mxu0 0
    %79 = vmatpush1.bf16.msra.mxu0 0
    %80 = vmatprep.subr.bf16.mxu0 0
    %81 = vmatpush1.bf16.msra.mxu0 0
    %82 = vmatprep.subr.bf16.mxu0 0
    %83 = vmatpush1.bf16.msra.mxu0 0
    %84 = vmatprep.subr.bf16.mxu0 0
    %85 = vmatpush1.bf16.msra.mxu0 0
    %86 = vmatprep.subr.bf16.mxu0 0
    %87 = vmatpush1.bf16.msra.mxu0 0
    %88 = vmatprep.subr.bf16.mxu0 0
    %89 = vmatpush1.bf16.msra.mxu0 0
    %90 = vmatprep.subr.bf16.mxu0 0
    %91 = vmatpush1.bf16.msra.mxu0 0
    %92 = vmatprep.mubr.bf16.mxu0 0
    %93 = vmatmul.mubr.bf16.gmra.mrb[0].mxu0 %v52
    %v94 = vpop.f32.mrb[0].mxu0
    %v95 = vadd.f32 %v36, %v94
    %v96 = vpop.f32.mrb[0].mxu0
    %v97 = vpop.f32.mrb[0].mxu0
    %v98 = vadd.f32 %v36, %v97
    %v99 = vpop.f32.mrb[0].mxu0
    %100 = vmatprep.mubr.bf16.mxu0 0
    %101 = vmatmul.mubr.bf16.gmra.mrb[0].mxu0 %v55
    %v102 = vpop.f32.mrb[0].mxu0
    %v103 = vadd.f32 %v36, %v102
    %v104 = vpop.f32.mrb[0].mxu0
    %v105 = vpop.f32.mrb[0].mxu0
    %v106 = vadd.f32 %v36, %v105
    %v107 = vpop.f32.mrb[0].mxu0
    %108 = vmatprep.mubr.bf16.mxu0 0
    %109 = vmatmul.mubr.bf16.gmra.mrb[0].mxu0 %v58
    %v110 = vpop.f32.mrb[0].mxu0
    %v111 = vadd.f32 %v36, %v110
    %v112 = vpop.f32.mrb[0].mxu0
    %v113 = vpop.f32.mrb[0].mxu0
    %v114 = vpop.f32.mrb[0].mxu0
    %115 = vdwg.mxu0
    %v116 = vmul.f32 %v95, 0.5
    %v117 = vmul.f32 %v98, 0.5
    %v118 = vmul.f32 %v103, 0.5
    %v119 = vmul.f32 %v106, 0.5
    %v120 = vmul.f32 %v111, 0.5
    %v121 = vtanh.pop %v116
    %v122 = vtanh.pop %v117
    %v123 = vtanh.pop %v118
    %v124 = vtanh.pop %v119
    %v125 = vtanh.pop %v120
    %v126 = vmul.f32 %v121, 0.5
    %v127 = vmul.f32 %v122, 0.5
    %v128 = vmul.f32 %v123, 0.5
    %v129 = vmul.f32 %v124, 0.5
    %v130 = vmul.f32 %v125, 0.5
    %v131 = vadd.f32 %v126, 0.5
    %v132 = vadd.f32 %v127, 0.5
    %v133 = vadd.f32 %v128, 0.5
    %v134 = vadd.f32 %v129, 0.5
    %v135 = vadd.f32 %v130, 0.5
    %v136 = vmul.f32 %v131, 1.2
    %v137 = vmul.f32 %v132, 1.2
    %v138 = vmul.f32 %v133, 1.2
    %v139 = vmul.f32 %v134, 1.2
    %v140 = vmul.f32 %v135, 1.2
    %v141 = vadd.f32 %v136, -0.1
    %v142 = vadd.f32 %v137, -0.1
    %v143 = vadd.f32 %v138, -0.1
    %v144 = vadd.f32 %v139, -0.1
    %v145 = vadd.f32 %v140, -0.1
    %v146 = vmax.f32 %v141, 0.0
    %v147 = vmax.f32 %v142, 0.0
    %v148 = vmax.f32 %v143, 0.0
    %v149 = vmax.f32 %v144, 0.0
    %v150 = vmax.f32 %v145, 0.0
    %v151 = vmin.f32 %v146, 1.0
    %v152 = vmin.f32 %v147, 1.0
    %v153 = vmin.f32 %v148, 1.0
    %v154 = vmin.f32 %v149, 1.0
    %v155 = vmin.f32 %v150, 1.0
    %v156 = vpack.c.bf16 %v152, %v151
    %v157 = vpack.c.bf16 %v154, %v153
    %v158 = vpack.c.bf16 %v155, %v155
    %v162 = vunpack.c.l.b16 %v156
    %v163 = vunpack.c.h.b16 %v156
    %v164 = vunpack.c.l.b16 %v157
    %v165 = vunpack.c.h.b16 %v157
    %v166 = vunpack.c.l.b16 %v158
    %v167 = vpack.c.b16 %v162, %v162
    %v168 = vpack.c.b16 %v163, %v163
    %v169 = vpack.c.b16 %v164, %v164
    %v170 = vpack.c.b16 %v165, %v165
    %v171 = vpack.c.b16 %v166, %v166
    %177 = vst [vmem:[#allocation2] sm:$0xf] %v167
    %178 = vst [vmem:[#allocation2 + $0x4] sm:$0xf] %v168
    %179 = vst [vmem:[#allocation2 + $0x8] sm:$0xf] %v169
    %180 = vst [vmem:[#allocation2 + $0xc] sm:$0xf] %v170
    %181 = vst [vmem:[#allocation2 + $0x10] sm:$0xf] %v171
    %v182 = vsub.f32 %v95, -2.3062878
    %v183 = vsub.f32 %v98, -2.3062878
    %v184 = vsub.f32 %v103, -2.3062878
    %v185 = vsub.f32 %v106, -2.3062878
    %v186 = vsub.f32 %v111, -2.3062878
    %v187 = vmul.f32 %v182, 0.5
    %v188 = vmul.f32 %v183, 0.5
    %v189 = vmul.f32 %v184, 0.5
    %v190 = vmul.f32 %v185, 0.5
    %v191 = vmul.f32 %v186, 0.5
    %v192 = vtanh.pop %v187
    %v193 = vtanh.pop %v188
    %v194 = vtanh.pop %v189
    %v195 = vtanh.pop %v190
    %v196 = vtanh.pop %v191
    %v197 = vmul.f32 %v192, 0.5
    %v198 = vmul.f32 %v193, 0.5
    %v199 = vmul.f32 %v194, 0.5
    %v200 = vmul.f32 %v195, 0.5
    %v201 = vmul.f32 %v196, 0.5
    %v202 = vadd.f32 %v197, 0.5
    %v203 = vadd.f32 %v198, 0.5
    %v204 = vadd.f32 %v199, 0.5
    %v205 = vadd.f32 %v200, 0.5
    %v206 = vadd.f32 %v201, 0.5
    %v207 = vadd.f32 %v202, %v203
    %v208 = vadd.f32 %v207, %v204
    %v209 = vadd.f32 %v208, %v205
    %v210 = vadd.f32 %v209, %v206
    %211 = vadd.xlane.f32.xlu0 %v210
    %v212 = vpop.xlane.xlu0 %211
    %v213 = vrot.slane %v212, 4
    %v214 = vadd.f32 %v212, %v213
    %v215 = vrot.slane %v214, 2
    %v216 = vadd.f32 %v214, %v215
    %v217 = vrot.slane %v216, 1
    %v218 = vadd.f32 %v216, %v217
    %s219 = vtos %v218
    %s220 = scalar_lea.smem [#allocation5], 0
    %221 = sst [smem:[%s220]] %s219
    // Predicated region
    $region14: #{tpu_custom_call.1} parent=1 // pred_check
      _
    $region15: #{tpu_custom_call.1} parent=1 // pred_check_branch
      %223 = sbr.rel (0) target = $region17
    $region16: #{tpu_custom_call.1} parent=1 // pred_region
      %s225 = ssub.s32 320, 320
      %226 = vsyncadd [#allocation3], %s225
      %s227 = sshll.u32 [#allocation2], 4
      %s228 = int_to_ptr.vmem [resolvable:$true] %s227
      %233 = dma.vmem_to_hbm [thread:$0]  %s228, 320, %s3, [#allocation3], 64, 64, 4
    $region17: #{tpu_custom_call.1} parent=1 // pred_fallthru
      _
    // Predicated region
    $region18: #{tpu_custom_call.1} parent=1 // pred_check
      _
    $region19: #{tpu_custom_call.1} parent=1 // pred_check_branch
      %235 = sbr.rel (0) target = $region21
    $region20: #{tpu_custom_call.1} parent=1 // pred_region
      %s237 = ssub.s32 16, 16
      %238 = vsyncadd [#allocation4], %s237
      %241 = dma.smem_to_hbm [#allocation5], 16, %s4, [#allocation4]
    $region21: #{tpu_custom_call.1} parent=1 // pred_fallthru
      _
    // Predicated region
    $region22: #{tpu_custom_call.1} parent=1 // pred_check
      _
    $region23: #{tpu_custom_call.1} parent=1 // pred_check_branch
      %243 = sbr.rel (0) target = $region25
    $region24: #{tpu_custom_call.1} parent=1 // pred_region
      %244 = dma.done [#allocation3], 320
    $region25: #{tpu_custom_call.1} parent=1 // pred_fallthru
      _
    // Predicated region
    $region26: #{tpu_custom_call.1} parent=1 // pred_check
      _
    $region27: #{tpu_custom_call.1} parent=1 // pred_check_branch
      %246 = sbr.rel (0) target = $region29
    $region28: #{tpu_custom_call.1} parent=1 // pred_region
      %247 = dma.done [#allocation4], 16
    $region29: #{tpu_custom_call.1} parent=1 // pred_fallthru
      _
    %248 = sfence
    %249 = vsyncpa [#allocation3], 1
    %250 = vsyncpa [#allocation4], 1

</llo_original>
